<compile_context>
chip_gen: v7x
topology: tpu7x:2x2x1
jax: 0.10.0
libtpu: 0.0.40
codegen_flags: <defaults>
</compile_context>

<pallas_src>
import jax
import jax.numpy as jnp
from jax.experimental import pallas as pl
from jax.experimental.pallas import tpu as pltpu

IGNORE_INDEX = -100
_NEG_BIG = -1e30  # finite "-inf": exp underflows to 0 and 0 * (-1e30) stays 0 (no NaN)


def _round_up(x: int, m: int) -> int:
    return (x + m - 1) // m * m


def _topic_loss_kernel(logits_ref, target_ref, loss_ref, total_ref, count_ref):
    i = pl.program_id(0)

    @pl.when(i == 0)
    def _init():
        total_ref[...] = jnp.zeros_like(total_ref)
        count_ref[...] = jnp.zeros_like(count_ref)

    x = logits_ref[...].astype(jnp.float32)            # (T, Cp), cast per tile
    t = target_ref[...]                                # (T, 1) int32

    # numerically stable shift; the row max is the only XLU reduction.
    m = jnp.max(x, axis=-1, keepdims=True)             # (T, 1)
    xs = x - m                                         # (T, Cp)
    e = jnp.exp(xs)                                    # EUP

    # target-logit "gather" via one-hot compare (no dynamic gather on TPU).
    col = jax.lax.broadcasted_iota(jnp.int32, x.shape, dimension=1)
    onehot = (col == t).astype(jnp.float32)            # (T, Cp)

    # Row reductions as matvecs against a ones vector -> MXU instead of XLU.
    ones = jnp.ones((x.shape[1], 1), dtype=jnp.float32)
    sum_e = jnp.dot(e, ones, preferred_element_type=jnp.float32,
                    precision=jax.lax.Precision.HIGHEST)            # (T, 1)
    tgt_shift = jnp.dot(onehot * xs, ones, preferred_element_type=jnp.float32,
                        precision=jax.lax.Precision.HIGHEST)        # (T, 1)

    # per-row CE: (m + log(sum_e)) - (m + xs[target]) = log(sum_e) - tgt_shift
    valid = t != IGNORE_INDEX                          # padded rows are invalid
    per_row = jnp.where(valid, jnp.log(sum_e) - tgt_shift, 0.0)     # (T, 1)

    total_ref[...] += jnp.sum(per_row, keepdims=True)               # (1, 1)
    count_ref[...] += jnp.sum(valid.astype(jnp.float32), keepdims=True)

    @pl.when(i == pl.num_programs(0) - 1)
    def _finalize():
        # count == 0 -> nan, matching PyTorch's mean over an all-ignored batch.
        loss_ref[...] = total_ref[...] / count_ref[...]


def topic_loss(logits: jax.Array, target: jax.Array, *, tile_n=None) -> jax.Array:
    """CrossEntropyLoss(ignore_index=-100, reduction='mean') over (N, C) logits.

    TODO(synk): out-of-range (non-ignore) target indices silently contribute a
    zero target logit instead of raising like PyTorch; validate upstream.
    """
    n, c = logits.shape
    itemsize = jnp.dtype(logits.dtype).itemsize
    c_pad = _round_up(c, 128)                          # lane-dense class axis

    if tile_n is None:
        # Size so a (TILE_N, C_pad) f32 temporary is <= ~2 MiB: a handful of such
        # temporaries plus double-buffered input tiles stays far below the
        # 32 MiB scoped-VMEM default (and v7x's 64 MiB physical VMEM).
        budget = 2 * 1024 * 1024
        tile_n = max(8, min(512, (budget // (c_pad * 4)) // 8 * 8,
                            _round_up(n, 8)))
    assert tile_n % 8 == 0, "tile_n must be a multiple of 8 sublanes"
    n_pad = _round_up(n, tile_n)
    num_tiles = n_pad // tile_n

    target2d = target.astype(jnp.int32).reshape(n, 1)
    if n_pad != n:
        target2d = jnp.pad(target2d, ((0, n_pad - n), (0, 0)),
                           constant_values=IGNORE_INDEX)
    if n_pad != n or c_pad != c:
        # single pad (only when needed); no dtype up-cast here -- logits go to
        # the kernel in their native dtype (bf16 halves HBM->VMEM traffic).
        logits = jnp.pad(logits, ((0, n_pad - n), (0, c_pad - c)),
                         constant_values=_NEG_BIG)

    cost = pl.CostEstimate(
        flops=int(6 * n_pad * c_pad),
        transcendentals=int(n_pad * c_pad + n_pad),
        bytes_accessed=int(n_pad * c_pad * itemsize + 4 * n_pad + 4),
    )

    out = pl.pallas_call(
        _topic_loss_kernel,
        out_shape=jax.ShapeDtypeStruct((1, 1), jnp.float32),
        grid_spec=pltpu.PrefetchScalarGridSpec(
            num_scalar_prefetch=0,
            grid=(num_tiles,),
            in_specs=[
                pl.BlockSpec((tile_n, c_pad), lambda i: (i, 0)),
                pl.BlockSpec((tile_n, 1), lambda i: (i, 0)),
            ],
            out_specs=pl.BlockSpec((1, 1), lambda i: (0, 0)),
            scratch_shapes=[
                pltpu.VMEM((1, 1), jnp.float32),   # running loss total
                pltpu.VMEM((1, 1), jnp.float32),   # running valid-row count
            ],
        ),
        compiler_params=pltpu.CompilerParams(
            dimension_semantics=("arbitrary",),    # reduction axis (accumulator)
        ),
        cost_estimate=cost,
    )(logits, target2d)
    return out[0, 0]


def _reference_loss(logits, target):
    # plain-JAX reference for sanity check
    logits = logits.astype(jnp.float32)
    lse = jax.nn.logsumexp(logits, axis=-1)
    safe_t = jnp.where(target == IGNORE_INDEX, 0, target)
    tgt_logit = jnp.take_along_axis(logits, safe_t[:, None], axis=-1)[:, 0]
    valid = target != IGNORE_INDEX
    per = jnp.where(valid, lse - tgt_logit, 0.0)
    return jnp.sum(per) / jnp.sum(valid.astype(jnp.float32))


if __name__ == "__main__":
    key = jax.random.PRNGKey(0)
    k1, k2, k3 = jax.random.split(key, 3)

    # small shapes consistent with the module: batch of 8, 32 topic classes
    N, C = 8, 32
    logits = jax.random.normal(k1, (N, C), dtype=jnp.float32)
    target = jax.random.randint(k2, (N,), 0, C, dtype=jnp.int32)
    target = target.at[3].set(IGNORE_INDEX)        # ignore_index=-100 semantics

    loss = topic_loss(logits, target)
    jax.block_until_ready(loss)
    ref = _reference_loss(logits, target)
    assert jnp.allclose(loss, ref, atol=2e-3, rtol=2e-3), (loss, ref)

    # ragged batch (row padding), multi-tile accumulation, bf16 input path
    N2, C2 = 13, 40
    logits2 = jax.random.normal(k3, (N2, C2), dtype=jnp.float32).astype(jnp.bfloat16)
    target2 = jax.random.randint(k2, (N2,), 0, C2, dtype=jnp.int32)
    target2 = target2.at[0].set(IGNORE_INDEX)
    loss2 = topic_loss(logits2, target2, tile_n=8)  # 2 grid tiles + padded rows/lanes
    jax.block_until_ready(loss2)
    ref2 = _reference_loss(logits2.astype(jnp.float32), target2)
    assert jnp.allclose(loss2, ref2, atol=2e-3, rtol=2e-3), (loss2, ref2)

    print("KERNEL_OK")
</pallas_src>

<mosaic_0001>
module attributes {stable_mosaic.version = 11 : i64} {
  func.func @_topic_loss_kernel(%arg0: i32, %arg1: memref<8x128xf32, #tpu.memory_space<vmem>>, %arg2: memref<8x1xi32, #tpu.memory_space<vmem>>, %arg3: memref<1x1xf32, #tpu.memory_space<vmem>>, %arg4: memref<1x1xf32, #tpu.memory_space<vmem>>, %arg5: memref<1x1xf32, #tpu.memory_space<vmem>>) attributes {dimension_semantics = [#tpu.dimension_semantics<arbitrary>], iteration_bounds = array<i64: 1>, scalar_prefetch = 0 : i64, scratch_operands = 2 : i64, tpu.core_type = #tpu.core_type<tc>, window_params = [{transform_indices = @transform_0, window_bounds = array<i64: 8, 128>}, {transform_indices = @transform_1, window_bounds = array<i64: 8, 1>}, {pipeline_mode = #tpu.pipeline_mode<synchronous>, transform_indices = @transform_2, window_bounds = array<i64: 1, 1>}]} {
    %c0_i32 = arith.constant 0 : i32
    %0 = arith.cmpi eq, %arg0, %c0_i32 : i32
    %1 = arith.extui %0 : i1 to i32
    %c0_i32_0 = arith.constant 0 : i32
    %2 = arith.cmpi ne, %1, %c0_i32_0 : i32
    scf.if %2 {
      %cst_20 = arith.constant 0.000000e+00 : f32
      %46 = vector.broadcast %cst_20 : f32 to vector<1x1xf32>
      %c0_21 = arith.constant 0 : index
      %c0_22 = arith.constant 0 : index
      %47 = vector.load %arg4[%c0_21, %c0_22] : memref<1x1xf32, #tpu.memory_space<vmem>>, vector<1x1xf32>
      tpu.vector_store %arg4[%c0_21, %c0_22], %46 {strides = array<i32>} : memref<1x1xf32, #tpu.memory_space<vmem>>, vector<1x1xf32>,
      %cst_23 = arith.constant 0.000000e+00 : f32
      %48 = vector.broadcast %cst_23 : f32 to vector<1x1xf32>
      %c0_24 = arith.constant 0 : index
      %c0_25 = arith.constant 0 : index
      %49 = vector.load %arg5[%c0_24, %c0_25] : memref<1x1xf32, #tpu.memory_space<vmem>>, vector<1x1xf32>
      tpu.vector_store %arg5[%c0_24, %c0_25], %48 {strides = array<i32>} : memref<1x1xf32, #tpu.memory_space<vmem>>, vector<1x1xf32>,
    } else {
    }
    %c0 = arith.constant 0 : index
    %c0_1 = arith.constant 0 : index
    %3 = vector.load %arg1[%c0, %c0_1] : memref<8x128xf32, #tpu.memory_space<vmem>>, vector<8x128xf32>
    %c0_2 = arith.constant 0 : index
    %c0_3 = arith.constant 0 : index
    %4 = vector.load %arg2[%c0_2, %c0_3] : memref<8x1xi32, #tpu.memory_space<vmem>>, vector<8x1xi32>
    %cst = arith.constant dense<0xFF800000> : vector<8xf32>
    %5 = vector.multi_reduction <maximumf>, %3, %cst [1] : vector<8x128xf32> to vector<8xf32>
    %6 = vector.shape_cast %5 : vector<8xf32> to vector<8x1xf32>
    %7 = vector.broadcast %6 : vector<8x1xf32> to vector<8x128xf32>
    %8 = arith.subf %3, %7 : vector<8x128xf32>
    %9 = math.exp %8 : vector<8x128xf32>
    %10 = tpu.iota {dimensions = array<i32: 1>} : vector<8x128xi32>
    %11 = vector.broadcast %4 : vector<8x1xi32> to vector<8x128xi32>
    %12 = arith.cmpi eq, %10, %11 : vector<8x128xi32>
    %13 = arith.extui %12 : vector<8x128xi1> to vector<8x128xi32>
    %14 = arith.sitofp %13 : vector<8x128xi32> to vector<8x128xf32>
    %cst_4 = arith.constant 1.000000e+00 : f32
    %15 = vector.broadcast %cst_4 : f32 to vector<128x1xf32>
    %cst_5 = arith.constant dense<0.000000e+00> : vector<8x1xf32>
    %16 = tpu.matmul %9, %15, %cst_5 {dimension_numbers = #tpu.dot_dimension_numbers<[1], [0], [0], [1], [0, 0, 1, 1], [], []>, precision = #tpu.contract_precision<fp32>} : vector<8x128xf32>, vector<128x1xf32>, vector<8x1xf32> -> vector<8x1xf32>
    %17 = arith.mulf %14, %8 : vector<8x128xf32>
    %cst_6 = arith.constant dense<0.000000e+00> : vector<8x1xf32>
    %18 = tpu.matmul %17, %15, %cst_6 {dimension_numbers = #tpu.dot_dimension_numbers<[1], [0], [0], [1], [0, 0, 1, 1], [], []>, precision = #tpu.contract_precision<fp32>} : vector<8x128xf32>, vector<128x1xf32>, vector<8x1xf32> -> vector<8x1xf32>
    %c-100_i32 = arith.constant -100 : i32
    %19 = vector.broadcast %c-100_i32 : i32 to vector<8x1xi32>
    %20 = arith.cmpi ne, %4, %19 : vector<8x1xi32>
    %21 = math.log %16 : vector<8x1xf32>
    %22 = arith.subf %21, %18 : vector<8x1xf32>
    %cst_7 = arith.constant 0.000000e+00 : f32
    %23 = vector.broadcast %cst_7 : f32 to vector<8x1xf32>
    %24 = arith.select %20, %22, %23 : vector<8x1xi1>, vector<8x1xf32>
    %c0_8 = arith.constant 0 : index
    %c0_9 = arith.constant 0 : index
    %25 = vector.load %arg4[%c0_8, %c0_9] : memref<1x1xf32, #tpu.memory_space<vmem>>, vector<1x1xf32>
    %26 = vector.shape_cast %24 : vector<8x1xf32> to vector<1x8x1xf32>
    %cst_10 = arith.constant dense<0.000000e+00> : vector<1xf32>
    %27 = vector.multi_reduction <add>, %26, %cst_10 [1, 2] : vector<1x8x1xf32> to vector<1xf32>
    %28 = vector.shape_cast %27 : vector<1xf32> to vector<1x1x1xf32>
    %29 = vector.extract %28[0, 0, 0] : f32 from vector<1x1x1xf32>
    %30 = vector.broadcast %29 : f32 to vector<1x1xf32>
    %31 = arith.addf %25, %30 : vector<1x1xf32>
    %c0_11 = arith.constant 0 : index
    %c0_12 = arith.constant 0 : index
    %32 = vector.load %arg4[%c0_11, %c0_12] : memref<1x1xf32, #tpu.memory_space<vmem>>, vector<1x1xf32>
    tpu.vector_store %arg4[%c0_11, %c0_12], %31 {strides = array<i32>} : memref<1x1xf32, #tpu.memory_space<vmem>>, vector<1x1xf32>,
    %c0_13 = arith.constant 0 : index
    %c0_14 = arith.constant 0 : index
    %33 = vector.load %arg5[%c0_13, %c0_14] : memref<1x1xf32, #tpu.memory_space<vmem>>, vector<1x1xf32>
    %34 = arith.extui %20 : vector<8x1xi1> to vector<8x1xi32>
    %35 = arith.sitofp %34 : vector<8x1xi32> to vector<8x1xf32>
    %36 = vector.shape_cast %35 : vector<8x1xf32> to vector<1x8x1xf32>
    %cst_15 = arith.constant dense<0.000000e+00> : vector<1xf32>
    %37 = vector.multi_reduction <add>, %36, %cst_15 [1, 2] : vector<1x8x1xf32> to vector<1xf32>
    %38 = vector.shape_cast %37 : vector<1xf32> to vector<1x1x1xf32>
    %39 = vector.extract %38[0, 0, 0] : f32 from vector<1x1x1xf32>
    %40 = vector.broadcast %39 : f32 to vector<1x1xf32>
    %41 = arith.addf %33, %40 : vector<1x1xf32>
    %c0_16 = arith.constant 0 : index
    %c0_17 = arith.constant 0 : index
    %42 = vector.load %arg5[%c0_16, %c0_17] : memref<1x1xf32, #tpu.memory_space<vmem>>, vector<1x1xf32>
    tpu.vector_store %arg5[%c0_16, %c0_17], %41 {strides = array<i32>} : memref<1x1xf32, #tpu.memory_space<vmem>>, vector<1x1xf32>,
    %c0_i32_18 = arith.constant 0 : i32
    %43 = arith.cmpi eq, %arg0, %c0_i32_18 : i32
    %44 = arith.extui %43 : i1 to i32
    %c0_i32_19 = arith.constant 0 : i32
    %45 = arith.cmpi ne, %44, %c0_i32_19 : i32
    scf.if %45 {
      %c0_20 = arith.constant 0 : index
      %c0_21 = arith.constant 0 : index
      %46 = vector.load %arg4[%c0_20, %c0_21] : memref<1x1xf32, #tpu.memory_space<vmem>>, vector<1x1xf32>
      %c0_22 = arith.constant 0 : index
      %c0_23 = arith.constant 0 : index
      %47 = vector.load %arg5[%c0_22, %c0_23] : memref<1x1xf32, #tpu.memory_space<vmem>>, vector<1x1xf32>
      %48 = arith.divf %46, %47 : vector<1x1xf32>
      %c0_24 = arith.constant 0 : index
      %c0_25 = arith.constant 0 : index
      %49 = vector.load %arg3[%c0_24, %c0_25] : memref<1x1xf32, #tpu.memory_space<vmem>>, vector<1x1xf32>
      tpu.vector_store %arg3[%c0_24, %c0_25], %48 {strides = array<i32>} : memref<1x1xf32, #tpu.memory_space<vmem>>, vector<1x1xf32>,
    } else {
    }
    return
  }
  func.func @transform_0(%arg0: i32) -> (i32, i32) {
    %c0_i32 = arith.constant 0 : i32
    %c0_i32_0 = arith.constant 0 : i32
    return %arg0, %c0_i32 : i32, i32
  }
  func.func @transform_1(%arg0: i32) -> (i32, i32) {
    %c0_i32 = arith.constant 0 : i32
    %c0_i32_0 = arith.constant 0 : i32
    return %arg0, %c0_i32 : i32, i32
  }
  func.func @transform_2(%arg0: i32) -> (i32, i32) {
    %c0_i32 = arith.constant 0 : i32
    %c0_i32_0 = arith.constant 0 : i32
    %c0_i32_1 = arith.constant 0 : i32
    return %c0_i32, %c0_i32_0 : i32, i32
  }
}

</mosaic_0001>

<llo_original>
// kernel: tpu_custom_call.1
$region0: #{tpu_custom_call.1}
  #allocation0 [shape = 'u32[]', space=smem, size = 0x4, offset = 0x4, fixed_abs, tag = 'smem constant byte address 0x4 - core index']
  #allocation1 [shape = 'u32[144,128]{1,0:T(1,128)}', space=vmem, size = 0x12000, scoped, tag = 'internal scratch']
  #allocation2 [shape = 'f32[1,1]{1,0:T(1,128)}', space=vmem, size = 0x200, scoped, tag = 'scratch operand']
  #allocation3 [shape = 'f32[1,1]{1,0:T(1,128)}', space=vmem, size = 0x200, scoped, tag = 'scratch operand']
  %s0 = inlined_call_operand.vmem [shape: f32[8,128], index: 0, kind: input, shape index: {}]
  %s1 = inlined_call_operand.vmem [shape: s32[8,1], index: 1, kind: input, shape index: {}]
  %s2 = inlined_call_operand.hbm [shape: f32[1,1], index: 2, kind: output, shape index: {}]
  %s3 = sld [smem:[#allocation0]]
  $region26: #{tpu_custom_call.1} parent=0
    _
  %s5 = ssub.s32 1, %s3
  %s6 = scalar_select 0, %s5, %s3
  $region1: #{tpu_custom_call.1} parent=0
    #allocation4 [shape = 'u8[512]{0}', space=vmem, size = 0x400, scoped, tag = 'output window, operand 0, single buffered']
    #allocation5 [shape = 's32[1]{0}', space=sflag, size = 0x4, scoped, tag = 'scoped memory for tpu_custom_call.1']
    %7 = vsyncpa [#allocation5], 0
    // Predicated region
    $region2: #{tpu_custom_call.1} parent=1 // pred_check
      _
    $region3: #{tpu_custom_call.1} parent=1 // pred_check_branch
      %9 = sbr.rel (0) target = $region5
    $region4: #{tpu_custom_call.1} parent=1 // pred_region
      _
    $region5: #{tpu_custom_call.1} parent=1 // pred_fallthru
      _
    // Predicated region
    $region6: #{tpu_custom_call.1} parent=1 // pred_check
      _
    $region7: #{tpu_custom_call.1} parent=1 // pred_check_branch
      %11 = sbr.rel (0) target = $region9
    $region8: #{tpu_custom_call.1} parent=1 // pred_region
      _
    $region9: #{tpu_custom_call.1} parent=1 // pred_fallthru
      _
    %p12 = scmp.eq.s32.totalorder 0, 0
    // Predicated region
    $region10: #{tpu_custom_call.1} parent=1 // pred_check
      %p13 = pneg %p12
    $region11: #{tpu_custom_call.1} parent=1 // pred_check_branch
      %15 = sbr.rel (%p13) target = $region13
    $region12: #{tpu_custom_call.1} parent=1 // pred_region
      %vm16 = vcmask 0
      %17 = vst.msk [vmem:[#allocation2] sm:$0x1] %vm16, 0.0
      %18 = vst.msk [vmem:[#allocation3] sm:$0x1] %vm16, 0.0
    $region13: #{tpu_custom_call.1} parent=1 // pred_fallthru
      _
    %v19 = vld [vmem:[%s0] sm:$0xff]
    %v20 = vld [vmem:[%s1] sm:$0xff]
    %21 = vmax.xlane.f32.xlu0 %v19
    %v22 = vpop.xlane.xlu0 %21
    %v23 = vsub.f32 %v19, %v22
    %v24 = vmul.f32 %v23, 1.442695
    %v25 = vpow.pop %v24
    %v26 = vlaneseq
    %v27 = vand.u32 %v26, 127
    %28 = vset.pattern.permute.xlu0 0
    %29 = vperm.xlu0 %28, %v20
    %v30 = vpop.permute.xlu0 %29
    %vm31 = vcmp.eq.s32.totalorder %v27, %v30
    %v32 = vsel %vm31, 1, 0
    %v33 = vcvt.s32.f32 %v32
    %34 = vmatprep.subr.mxu0 0.0
    %35 = vmatpush1.msra.mxu0 1.0
    %36 = vmatprep.subr.mxu0 0.0
    %37 = vmatpush1.msra.mxu0 1.0
    %38 = vmatprep.subr.mxu0 0.0
    %39 = vmatpush1.msra.mxu0 1.0
    %40 = vmatprep.subr.mxu0 0.0
    %41 = vmatpush1.msra.mxu0 1.0
    %42 = vmatprep.subr.mxu0 0.0
    %43 = vmatpush1.msra.mxu0 1.0
    %44 = vmatprep.subr.mxu0 0.0
    %45 = vmatpush1.msra.mxu0 1.0
    %46 = vmatprep.subr.mxu0 0.0
    %47 = vmatpush1.msra.mxu0 1.0
    %48 = vmatprep.subr.mxu0 0.0
    %49 = vmatpush1.msra.mxu0 1.0
    %50 = vmatprep.subr.mxu0 0.0
    %51 = vmatpush1.msra.mxu0 1.0
    %52 = vmatprep.subr.mxu0 0.0
    %53 = vmatpush1.msra.mxu0 1.0
    %54 = vmatprep.subr.mxu0 0.0
    %55 = vmatpush1.msra.mxu0 1.0
    %56 = vmatprep.subr.mxu0 0.0
    %57 = vmatpush1.msra.mxu0 1.0
    %58 = vmatprep.subr.mxu0 0.0
    %59 = vmatpush1.msra.mxu0 1.0
    %60 = vmatprep.subr.mxu0 0.0
    %61 = vmatpush1.msra.mxu0 1.0
    %62 = vmatprep.subr.mxu0 0.0
    %63 = vmatpush1.msra.mxu0 1.0
    %64 = vmatprep.subr.mxu0 0.0
    %65 = vmatpush1.msra.mxu0 1.0
    %66 = vmatprep.subr.mxu0 0.0
    %67 = vmatpush1.msra.mxu0 0.0
    %68 = vmatprep.subr.mxu0 0.0
    %69 = vmatpush1.msra.mxu0 0.0
    %70 = vmatprep.subr.mxu0 0.0
    %71 = vmatpush1.msra.mxu0 0.0
    %72 = vmatprep.subr.mxu0 0.0
    %73 = vmatpush1.msra.mxu0 0.0
    %74 = vmatprep.subr.mxu0 0.0
    %75 = vmatpush1.msra.mxu0 0.0
    %76 = vmatprep.subr.mxu0 0.0
    %77 = vmatpush1.msra.mxu0 0.0
    %78 = vmatprep.subr.mxu0 0.0
    %79 = vmatpush1.msra.mxu0 0.0
    %80 = vmatprep.subr.mxu0 0.0
    %81 = vmatpush1.msra.mxu0 0.0
    %82 = vmatprep.subr.mxu0 0.0
    %83 = vmatpush1.msra.mxu0 0.0
    %84 = vmatprep.subr.mxu0 0.0
    %85 = vmatpush1.msra.mxu0 0.0
    %86 = vmatprep.subr.mxu0 0.0
    %87 = vmatpush1.msra.mxu0 0.0
    %88 = vmatprep.subr.mxu0 0.0
    %89 = vmatpush1.msra.mxu0 0.0
    %90 = vmatprep.subr.mxu0 0.0
    %91 = vmatpush1.msra.mxu0 0.0
    %92 = vmatprep.subr.mxu0 0.0
    %93 = vmatpush1.msra.mxu0 0.0
    %94 = vmatprep.subr.mxu0 0.0
    %95 = vmatpush1.msra.mxu0 0.0
    %96 = vmatprep.subr.mxu0 0.0
    %97 = vmatpush1.msra.mxu0 0.0
    %98 = vmatprep.mubr.f32.mxu0 0.0
    %v99 = vand.u32 %v25, 4294901760
    %v100 = vsub.f32 %v25, %v99
    %v101 = vand.u32 %v100, 4294901760
    %v102 = vsub.f32 %v100, %v101
    %v103 = vand.u32 %v102, 4294901760
    %104 = vmatmul.mubr.f32.gmra.mrb[0].mxu0 %v103
    %v105 = vpop.f32.mrb[0].mxu0
    %v106 = vadd.f32 0.0, %v105
    %v107 = vpop.f32.mrb[0].mxu0
    %108 = vdwg.mxu0
    %109 = vmatprep.subr.mxu0 0.0
    %110 = vmatpush1.msra.mxu0 0.0
    %111 = vmatprep.subr.mxu0 0.0
    %112 = vmatpush1.msra.mxu0 0.0
    %113 = vmatprep.subr.mxu0 0.0
    %114 = vmatpush1.msra.mxu0 0.0
    %115 = vmatprep.subr.mxu0 0.0
    %116 = vmatpush1.msra.mxu0 0.0
    %117 = vmatprep.subr.mxu0 0.0
    %118 = vmatpush1.msra.mxu0 0.0
    %119 = vmatprep.subr.mxu0 0.0
    %120 = vmatpush1.msra.mxu0 0.0
    %121 = vmatprep.subr.mxu0 0.0
    %122 = vmatpush1.msra.mxu0 0.0
    %123 = vmatprep.subr.mxu0 0.0
    %124 = vmatpush1.msra.mxu0 0.0
    %125 = vmatprep.subr.mxu0 0.0
    %126 = vmatpush1.msra.mxu0 0.0
    %127 = vmatprep.subr.mxu0 0.0
    %128 = vmatpush1.msra.mxu0 0.0
    %129 = vmatprep.subr.mxu0 0.0
    %130 = vmatpush1.msra.mxu0 0.0
    %131 = vmatprep.subr.mxu0 0.0
    %132 = vmatpush1.msra.mxu0 0.0
    %133 = vmatprep.subr.mxu0 0.0
    %134 = vmatpush1.msra.mxu0 0.0
    %135 = vmatprep.subr.mxu0 0.0
    %136 = vmatpush1.msra.mxu0 0.0
    %137 = vmatprep.subr.mxu0 0.0
    %138 = vmatpush1.msra.mxu0 0.0
    %139 = vmatprep.subr.mxu0 0.0
    %140 = vmatpush1.msra.mxu0 0.0
    %141 = vmatprep.subr.mxu0 0.0
    %142 = vmatpush1.msra.mxu0 0.0
    %143 = vmatprep.subr.mxu0 0.0
    %144 = vmatpush1.msra.mxu0 0.0
    %145 = vmatprep.subr.mxu0 0.0
    %146 = vmatpush1.msra.mxu0 0.0
    %147 = vmatprep.subr.mxu0 0.0
    %148 = vmatpush1.msra.mxu0 0.0
    %149 = vmatprep.subr.mxu0 0.0
    %150 = vmatpush1.msra.mxu0 0.0
    %151 = vmatprep.subr.mxu0 0.0
    %152 = vmatpush1.msra.mxu0 0.0
    %153 = vmatprep.subr.mxu0 0.0
    %154 = vmatpush1.msra.mxu0 0.0
    %155 = vmatprep.subr.mxu0 0.0
    %156 = vmatpush1.msra.mxu0 0.0
    %157 = vmatprep.subr.mxu0 0.0
    %158 = vmatpush1.msra.mxu0 0.0
    %159 = vmatprep.subr.mxu0 0.0
    %160 = vmatpush1.msra.mxu0 0.0
    %161 = vmatprep.subr.mxu0 0.0
    %162 = vmatpush1.msra.mxu0 0.0
    %163 = vmatprep.subr.mxu0 0.0
    %164 = vmatpush1.msra.mxu0 0.0
    %165 = vmatprep.subr.mxu0 0.0
    %166 = vmatpush1.msra.mxu0 0.0
    %167 = vmatprep.subr.mxu0 0.0
    %168 = vmatpush1.msra.mxu0 0.0
    %169 = vmatprep.subr.mxu0 0.0
    %170 = vmatpush1.msra.mxu0 0.0
    %171 = vmatprep.subr.mxu0 0.0
    %172 = vmatpush1.msra.mxu0 0.0
    %173 = vmatprep.mubr.f32.mxu0 0.0
    %v174 = vand.u32 %v25, 4294901760
    %175 = vmatmul.mubr.f32.gmra.mrb[0].mxu0 %v174
    %v176 = vpop.f32.mrb[0].mxu0
    %v177 = vadd.f32 %v106, %v176
    %v178 = vpop.f32.mrb[0].mxu0
    %179 = vdwg.mxu0
    %180 = vmatprep.subr.mxu0 0.0
    %181 = vmatpush1.msra.mxu0 0.0
    %182 = vmatprep.subr.mxu0 0.0
    %183 = vmatpush1.msra.mxu0 0.0
    %184 = vmatprep.subr.mxu0 0.0
    %185 = vmatpush1.msra.mxu0 0.0
    %186 = vmatprep.subr.mxu0 0.0
    %187 = vmatpush1.msra.mxu0 0.0
    %188 = vmatprep.subr.mxu0 0.0
    %189 = vmatpush1.msra.mxu0 0.0
    %190 = vmatprep.subr.mxu0 0.0
    %191 = vmatpush1.msra.mxu0 0.0
    %192 = vmatprep.subr.mxu0 0.0
    %193 = vmatpush1.msra.mxu0 0.0
    %194 = vmatprep.subr.mxu0 0.0
    %195 = vmatpush1.msra.mxu0 0.0
    %196 = vmatprep.subr.mxu0 0.0
    %197 = vmatpush1.msra.mxu0 0.0
    %198 = vmatprep.subr.mxu0 0.0
    %199 = vmatpush1.msra.mxu0 0.0
    %200 = vmatprep.subr.mxu0 0.0
    %201 = vmatpush1.msra.mxu0 0.0
    %202 = vmatprep.subr.mxu0 0.0
    %203 = vmatpush1.msra.mxu0 0.0
    %204 = vmatprep.subr.mxu0 0.0
    %205 = vmatpush1.msra.mxu0 0.0
    %206 = vmatprep.subr.mxu0 0.0
    %207 = vmatpush1.msra.mxu0 0.0
    %208 = vmatprep.subr.mxu0 0.0
    %209 = vmatpush1.msra.mxu0 0.0
    %210 = vmatprep.subr.mxu0 0.0
    %211 = vmatpush1.msra.mxu0 0.0
    %212 = vmatprep.subr.mxu0 0.0
    %213 = vmatpush1.msra.mxu0 0.0
    %214 = vmatprep.subr.mxu0 0.0
    %215 = vmatpush1.msra.mxu0 0.0
    %216 = vmatprep.subr.mxu0 0.0
    %217 = vmatpush1.msra.mxu0 0.0
    %218 = vmatprep.subr.mxu0 0.0
    %219 = vmatpush1.msra.mxu0 0.0
    %220 = vmatprep.subr.mxu0 0.0
    %221 = vmatpush1.msra.mxu0 0.0
    %222 = vmatprep.subr.mxu0 0.0
    %223 = vmatpush1.msra.mxu0 0.0
    %224 = vmatprep.subr.mxu0 0.0
    %225 = vmatpush1.msra.mxu0 0.0
    %226 = vmatprep.subr.mxu0 0.0
    %227 = vmatpush1.msra.mxu0 0.0
    %228 = vmatprep.subr.mxu0 0.0
    %229 = vmatpush1.msra.mxu0 0.0
    %230 = vmatprep.subr.mxu0 0.0
    %231 = vmatpush1.msra.mxu0 0.0
    %232 = vmatprep.subr.mxu0 0.0
    %233 = vmatpush1.msra.mxu0 0.0
    %234 = vmatprep.subr.mxu0 0.0
    %235 = vmatpush1.msra.mxu0 0.0
    %236 = vmatprep.subr.mxu0 0.0
    %237 = vmatpush1.msra.mxu0 0.0
    %238 = vmatprep.subr.mxu0 0.0
    %239 = vmatpush1.msra.mxu0 0.0
    %240 = vmatprep.subr.mxu0 0.0
    %241 = vmatpush1.msra.mxu0 0.0
    %242 = vmatprep.subr.mxu0 0.0
    %243 = vmatpush1.msra.mxu0 0.0
    %244 = vmatprep.mubr.f32.mxu0 0.0
    %v245 = vand.u32 %v25, 4294901760
    %v246 = vsub.f32 %v25, %v245
    %247 = vmatmul.mubr.f32.gmra.mrb[0].mxu0 %v246
    %v248 = vpop.f32.mrb[0].mxu0
    %v249 = vadd.f32 %v177, %v248
    %v250 = vpop.f32.mrb[0].mxu0
    %251 = vdwg.mxu0
    %252 = vmatprep.subr.mxu0 0.0
    %253 = vmatpush1.msra.mxu0 1.0
    %254 = vmatprep.subr.mxu0 0.0
    %255 = vmatpush1.msra.mxu0 1.0
    %256 = vmatprep.subr.mxu0 0.0
    %257 = vmatpush1.msra.mxu0 1.0
    %258 = vmatprep.subr.mxu0 0.0
    %259 = vmatpush1.msra.mxu0 1.0
    %260 = vmatprep.subr.mxu0 0.0
    %261 = vmatpush1.msra.mxu0 1.0
    %262 = vmatprep.subr.mxu0 0.0
    %263 = vmatpush1.msra.mxu0 1.0
    %264 = vmatprep.subr.mxu0 0.0
    %265 = vmatpush1.msra.mxu0 1.0
    %266 = vmatprep.subr.mxu0 0.0
    %267 = vmatpush1.msra.mxu0 1.0
    %268 = vmatprep.subr.mxu0 0.0
    %269 = vmatpush1.msra.mxu0 1.0
    %270 = vmatprep.subr.mxu0 0.0
    %271 = vmatpush1.msra.mxu0 1.0
    %272 = vmatprep.subr.mxu0 0.0
    %273 = vmatpush1.msra.mxu0 1.0
    %274 = vmatprep.subr.mxu0 0.0
    %275 = vmatpush1.msra.mxu0 1.0
    %276 = vmatprep.subr.mxu0 0.0
    %277 = vmatpush1.msra.mxu0 1.0
    %278 = vmatprep.subr.mxu0 0.0
    %279 = vmatpush1.msra.mxu0 1.0
    %280 = vmatprep.subr.mxu0 0.0
    %281 = vmatpush1.msra.mxu0 1.0
    %282 = vmatprep.subr.mxu0 0.0
    %283 = vmatpush1.msra.mxu0 1.0
    %284 = vmatprep.subr.mxu0 0.0
    %285 = vmatpush1.msra.mxu0 0.0
    %286 = vmatprep.subr.mxu0 0.0
    %287 = vmatpush1.msra.mxu0 0.0
    %288 = vmatprep.subr.mxu0 0.0
    %289 = vmatpush1.msra.mxu0 0.0
    %290 = vmatprep.subr.mxu0 0.0
    %291 = vmatpush1.msra.mxu0 0.0
    %292 = vmatprep.subr.mxu0 0.0
    %293 = vmatpush1.msra.mxu0 0.0
    %294 = vmatprep.subr.mxu0 0.0
    %295 = vmatpush1.msra.mxu0 0.0
    %296 = vmatprep.subr.mxu0 0.0
    %297 = vmatpush1.msra.mxu0 0.0
    %298 = vmatprep.subr.mxu0 0.0
    %299 = vmatpush1.msra.mxu0 0.0
    %300 = vmatprep.subr.mxu0 0.0
    %301 = vmatpush1.msra.mxu0 0.0
    %302 = vmatprep.subr.mxu0 0.0
    %303 = vmatpush1.msra.mxu0 0.0
    %304 = vmatprep.subr.mxu0 0.0
    %305 = vmatpush1.msra.mxu0 0.0
    %306 = vmatprep.subr.mxu0 0.0
    %307 = vmatpush1.msra.mxu0 0.0
    %308 = vmatprep.subr.mxu0 0.0
    %309 = vmatpush1.msra.mxu0 0.0
    %310 = vmatprep.subr.mxu0 0.0
    %311 = vmatpush1.msra.mxu0 0.0
    %312 = vmatprep.subr.mxu0 0.0
    %313 = vmatpush1.msra.mxu0 0.0
    %314 = vmatprep.subr.mxu0 0.0
    %315 = vmatpush1.msra.mxu0 0.0
    %316 = vmatprep.mubr.f32.mxu0 0.0
    %v317 = vand.u32 %v25, 4294901760
    %v318 = vsub.f32 %v25, %v317
    %v319 = vand.u32 %v318, 4294901760
    %320 = vmatmul.mubr.f32.gmra.mrb[0].mxu0 %v319
    %v321 = vpop.f32.mrb[0].mxu0
    %v322 = vadd.f32 %v249, %v321
    %v323 = vpop.f32.mrb[0].mxu0
    %324 = vdwg.mxu0
    %325 = vmatprep.subr.mxu0 0.0
    %326 = vmatpush1.msra.mxu0 0.0
    %327 = vmatprep.subr.mxu0 0.0
    %328 = vmatpush1.msra.mxu0 0.0
    %329 = vmatprep.subr.mxu0 0.0
    %330 = vmatpush1.msra.mxu0 0.0
    %331 = vmatprep.subr.mxu0 0.0
    %332 = vmatpush1.msra.mxu0 0.0
    %333 = vmatprep.subr.mxu0 0.0
    %334 = vmatpush1.msra.mxu0 0.0
    %335 = vmatprep.subr.mxu0 0.0
    %336 = vmatpush1.msra.mxu0 0.0
    %337 = vmatprep.subr.mxu0 0.0
    %338 = vmatpush1.msra.mxu0 0.0
    %339 = vmatprep.subr.mxu0 0.0
    %340 = vmatpush1.msra.mxu0 0.0
    %341 = vmatprep.subr.mxu0 0.0
    %342 = vmatpush1.msra.mxu0 0.0
    %343 = vmatprep.subr.mxu0 0.0
    %344 = vmatpush1.msra.mxu0 0.0
    %345 = vmatprep.subr.mxu0 0.0
    %346 = vmatpush1.msra.mxu0 0.0
    %347 = vmatprep.subr.mxu0 0.0
    %348 = vmatpush1.msra.mxu0 0.0
    %349 = vmatprep.subr.mxu0 0.0
    %350 = vmatpush1.msra.mxu0 0.0
    %351 = vmatprep.subr.mxu0 0.0
    %352 = vmatpush1.msra.mxu0 0.0
    %353 = vmatprep.subr.mxu0 0.0
    %354 = vmatpush1.msra.mxu0 0.0
    %355 = vmatprep.subr.mxu0 0.0
    %356 = vmatpush1.msra.mxu0 0.0
    %357 = vmatprep.subr.mxu0 0.0
    %358 = vmatpush1.msra.mxu0 0.0
    %359 = vmatprep.subr.mxu0 0.0
    %360 = vmatpush1.msra.mxu0 0.0
    %361 = vmatprep.subr.mxu0 0.0
    %362 = vmatpush1.msra.mxu0 0.0
    %363 = vmatprep.subr.mxu0 0.0
    %364 = vmatpush1.msra.mxu0 0.0
    %365 = vmatprep.subr.mxu0 0.0
    %366 = vmatpush1.msra.mxu0 0.0
    %367 = vmatprep.subr.mxu0 0.0
    %368 = vmatpush1.msra.mxu0 0.0
    %369 = vmatprep.subr.mxu0 0.0
    %370 = vmatpush1.msra.mxu0 0.0
    %371 = vmatprep.subr.mxu0 0.0
    %372 = vmatpush1.msra.mxu0 0.0
    %373 = vmatprep.subr.mxu0 0.0
    %374 = vmatpush1.msra.mxu0 0.0
    %375 = vmatprep.subr.mxu0 0.0
    %376 = vmatpush1.msra.mxu0 0.0
    %377 = vmatprep.subr.mxu0 0.0
    %378 = vmatpush1.msra.mxu0 0.0
    %379 = vmatprep.subr.mxu0 0.0
    %380 = vmatpush1.msra.mxu0 0.0
    %381 = vmatprep.subr.mxu0 0.0
    %382 = vmatpush1.msra.mxu0 0.0
    %383 = vmatprep.subr.mxu0 0.0
    %384 = vmatpush1.msra.mxu0 0.0
    %385 = vmatprep.subr.mxu0 0.0
    %386 = vmatpush1.msra.mxu0 0.0
    %387 = vmatprep.subr.mxu0 0.0
    %388 = vmatpush1.msra.mxu0 0.0
    %389 = vmatprep.mubr.f32.mxu0 0.0
    %v390 = vand.u32 %v25, 4294901760
    %391 = vmatmul.mubr.f32.gmra.mrb[0].mxu0 %v390
    %v392 = vpop.f32.mrb[0].mxu0
    %v393 = vadd.f32 %v322, %v392
    %v394 = vpop.f32.mrb[0].mxu0
    %395 = vdwg.mxu0
    %396 = vmatprep.subr.mxu0 0.0
    %397 = vmatpush1.msra.mxu0 1.0
    %398 = vmatprep.subr.mxu0 0.0
    %399 = vmatpush1.msra.mxu0 1.0
    %400 = vmatprep.subr.mxu0 0.0
    %401 = vmatpush1.msra.mxu0 1.0
    %402 = vmatprep.subr.mxu0 0.0
    %403 = vmatpush1.msra.mxu0 1.0
    %404 = vmatprep.subr.mxu0 0.0
    %405 = vmatpush1.msra.mxu0 1.0
    %406 = vmatprep.subr.mxu0 0.0
    %407 = vmatpush1.msra.mxu0 1.0
    %408 = vmatprep.subr.mxu0 0.0
    %409 = vmatpush1.msra.mxu0 1.0
    %410 = vmatprep.subr.mxu0 0.0
    %411 = vmatpush1.msra.mxu0 1.0
    %412 = vmatprep.subr.mxu0 0.0
    %413 = vmatpush1.msra.mxu0 1.0
    %414 = vmatprep.subr.mxu0 0.0
    %415 = vmatpush1.msra.mxu0 1.0
    %416 = vmatprep.subr.mxu0 0.0
    %417 = vmatpush1.msra.mxu0 1.0
    %418 = vmatprep.subr.mxu0 0.0
    %419 = vmatpush1.msra.mxu0 1.0
    %420 = vmatprep.subr.mxu0 0.0
    %421 = vmatpush1.msra.mxu0 1.0
    %422 = vmatprep.subr.mxu0 0.0
    %423 = vmatpush1.msra.mxu0 1.0
    %424 = vmatprep.subr.mxu0 0.0
    %425 = vmatpush1.msra.mxu0 1.0
    %426 = vmatprep.subr.mxu0 0.0
    %427 = vmatpush1.msra.mxu0 1.0
    %428 = vmatprep.subr.mxu0 0.0
    %429 = vmatpush1.msra.mxu0 0.0
    %430 = vmatprep.subr.mxu0 0.0
    %431 = vmatpush1.msra.mxu0 0.0
    %432 = vmatprep.subr.mxu0 0.0
    %433 = vmatpush1.msra.mxu0 0.0
    %434 = vmatprep.subr.mxu0 0.0
    %435 = vmatpush1.msra.mxu0 0.0
    %436 = vmatprep.subr.mxu0 0.0
    %437 = vmatpush1.msra.mxu0 0.0
    %438 = vmatprep.subr.mxu0 0.0
    %439 = vmatpush1.msra.mxu0 0.0
    %440 = vmatprep.subr.mxu0 0.0
    %441 = vmatpush1.msra.mxu0 0.0
    %442 = vmatprep.subr.mxu0 0.0
    %443 = vmatpush1.msra.mxu0 0.0
    %444 = vmatprep.subr.mxu0 0.0
    %445 = vmatpush1.msra.mxu0 0.0
    %446 = vmatprep.subr.mxu0 0.0
    %447 = vmatpush1.msra.mxu0 0.0
    %448 = vmatprep.subr.mxu0 0.0
    %449 = vmatpush1.msra.mxu0 0.0
    %450 = vmatprep.subr.mxu0 0.0
    %451 = vmatpush1.msra.mxu0 0.0
    %452 = vmatprep.subr.mxu0 0.0
    %453 = vmatpush1.msra.mxu0 0.0
    %454 = vmatprep.subr.mxu0 0.0
    %455 = vmatpush1.msra.mxu0 0.0
    %456 = vmatprep.subr.mxu0 0.0
    %457 = vmatpush1.msra.mxu0 0.0
    %458 = vmatprep.subr.mxu0 0.0
    %459 = vmatpush1.msra.mxu0 0.0
    %460 = vmatprep.mubr.f32.mxu0 0.0
    %v461 = vand.u32 %v25, 4294901760
    %462 = vmatmul.mubr.f32.gmra.mrb[0].mxu0 %v461
    %v463 = vpop.f32.mrb[0].mxu0
    %v464 = vadd.f32 %v393, %v463
    %v465 = vpop.f32.mrb[0].mxu0
    %466 = vdwg.mxu0
    %v467 = vmul.f32 %v33, %v23
    %468 = vmatprep.subr.mxu0 0.0
    %469 = vmatpush1.msra.mxu0 1.0
    %470 = vmatprep.subr.mxu0 0.0
    %471 = vmatpush1.msra.mxu0 1.0
    %472 = vmatprep.subr.mxu0 0.0
    %473 = vmatpush1.msra.mxu0 1.0
    %474 = vmatprep.subr.mxu0 0.0
    %475 = vmatpush1.msra.mxu0 1.0
    %476 = vmatprep.subr.mxu0 0.0
    %477 = vmatpush1.msra.mxu0 1.0
    %478 = vmatprep.subr.mxu0 0.0
    %479 = vmatpush1.msra.mxu0 1.0
    %480 = vmatprep.subr.mxu0 0.0
    %481 = vmatpush1.msra.mxu0 1.0
    %482 = vmatprep.subr.mxu0 0.0
    %483 = vmatpush1.msra.mxu0 1.0
    %484 = vmatprep.subr.mxu0 0.0
    %485 = vmatpush1.msra.mxu0 1.0
    %486 = vmatprep.subr.mxu0 0.0
    %487 = vmatpush1.msra.mxu0 1.0
    %488 = vmatprep.subr.mxu0 0.0
    %489 = vmatpush1.msra.mxu0 1.0
    %490 = vmatprep.subr.mxu0 0.0
    %491 = vmatpush1.msra.mxu0 1.0
    %492 = vmatprep.subr.mxu0 0.0
    %493 = vmatpush1.msra.mxu0 1.0
    %494 = vmatprep.subr.mxu0 0.0
    %495 = vmatpush1.msra.mxu0 1.0
    %496 = vmatprep.subr.mxu0 0.0
    %497 = vmatpush1.msra.mxu0 1.0
    %498 = vmatprep.subr.mxu0 0.0
    %499 = vmatpush1.msra.mxu0 1.0
    %500 = vmatprep.subr.mxu0 0.0
    %501 = vmatpush1.msra.mxu0 0.0
    %502 = vmatprep.subr.mxu0 0.0
    %503 = vmatpush1.msra.mxu0 0.0
    %504 = vmatprep.subr.mxu0 0.0
    %505 = vmatpush1.msra.mxu0 0.0
    %506 = vmatprep.subr.mxu0 0.0
    %507 = vmatpush1.msra.mxu0 0.0
    %508 = vmatprep.subr.mxu0 0.0
    %509 = vmatpush1.msra.mxu0 0.0
    %510 = vmatprep.subr.mxu0 0.0
    %511 = vmatpush1.msra.mxu0 0.0
    %512 = vmatprep.subr.mxu0 0.0
    %513 = vmatpush1.msra.mxu0 0.0
    %514 = vmatprep.subr.mxu0 0.0
    %515 = vmatpush1.msra.mxu0 0.0
    %516 = vmatprep.subr.mxu0 0.0
    %517 = vmatpush1.msra.mxu0 0.0
    %518 = vmatprep.subr.mxu0 0.0
    %519 = vmatpush1.msra.mxu0 0.0
    %520 = vmatprep.subr.mxu0 0.0
    %521 = vmatpush1.msra.mxu0 0.0
    %522 = vmatprep.subr.mxu0 0.0
    %523 = vmatpush1.msra.mxu0 0.0
    %524 = vmatprep.subr.mxu0 0.0
    %525 = vmatpush1.msra.mxu0 0.0
    %526 = vmatprep.subr.mxu0 0.0
    %527 = vmatpush1.msra.mxu0 0.0
    %528 = vmatprep.subr.mxu0 0.0
    %529 = vmatpush1.msra.mxu0 0.0
    %530 = vmatprep.subr.mxu0 0.0
    %531 = vmatpush1.msra.mxu0 0.0
    %532 = vmatprep.mubr.f32.mxu0 0.0
    %v533 = vand.u32 %v467, 4294901760
    %v534 = vsub.f32 %v467, %v533
    %v535 = vand.u32 %v534, 4294901760
    %v536 = vsub.f32 %v534, %v535
    %v537 = vand.u32 %v536, 4294901760
    %538 = vmatmul.mubr.f32.gmra.mrb[0].mxu0 %v537
    %v539 = vpop.f32.mrb[0].mxu0
    %v540 = vadd.f32 0.0, %v539
    %v541 = vpop.f32.mrb[0].mxu0
    %542 = vdwg.mxu0
    %543 = vmatprep.subr.mxu0 0.0
    %544 = vmatpush1.msra.mxu0 0.0
    %545 = vmatprep.subr.mxu0 0.0
    %546 = vmatpush1.msra.mxu0 0.0
    %547 = vmatprep.subr.mxu0 0.0
    %548 = vmatpush1.msra.mxu0 0.0
    %549 = vmatprep.subr.mxu0 0.0
    %550 = vmatpush1.msra.mxu0 0.0
    %551 = vmatprep.subr.mxu0 0.0
    %552 = vmatpush1.msra.mxu0 0.0
    %553 = vmatprep.subr.mxu0 0.0
    %554 = vmatpush1.msra.mxu0 0.0
    %555 = vmatprep.subr.mxu0 0.0
    %556 = vmatpush1.msra.mxu0 0.0
    %557 = vmatprep.subr.mxu0 0.0
    %558 = vmatpush1.msra.mxu0 0.0
    %559 = vmatprep.subr.mxu0 0.0
    %560 = vmatpush1.msra.mxu0 0.0
    %561 = vmatprep.subr.mxu0 0.0
    %562 = vmatpush1.msra.mxu0 0.0
    %563 = vmatprep.subr.mxu0 0.0
    %564 = vmatpush1.msra.mxu0 0.0
    %565 = vmatprep.subr.mxu0 0.0
    %566 = vmatpush1.msra.mxu0 0.0
    %567 = vmatprep.subr.mxu0 0.0
    %568 = vmatpush1.msra.mxu0 0.0
    %569 = vmatprep.subr.mxu0 0.0
    %570 = vmatpush1.msra.mxu0 0.0
    %571 = vmatprep.subr.mxu0 0.0
    %572 = vmatpush1.msra.mxu0 0.0
    %573 = vmatprep.subr.mxu0 0.0
    %574 = vmatpush1.msra.mxu0 0.0
    %575 = vmatprep.subr.mxu0 0.0
    %576 = vmatpush1.msra.mxu0 0.0
    %577 = vmatprep.subr.mxu0 0.0
    %578 = vmatpush1.msra.mxu0 0.0
    %579 = vmatprep.subr.mxu0 0.0
    %580 = vmatpush1.msra.mxu0 0.0
    %581 = vmatprep.subr.mxu0 0.0
    %582 = vmatpush1.msra.mxu0 0.0
    %583 = vmatprep.subr.mxu0 0.0
    %584 = vmatpush1.msra.mxu0 0.0
    %585 = vmatprep.subr.mxu0 0.0
    %586 = vmatpush1.msra.mxu0 0.0
    %587 = vmatprep.subr.mxu0 0.0
    %588 = vmatpush1.msra.mxu0 0.0
    %589 = vmatprep.subr.mxu0 0.0
    %590 = vmatpush1.msra.mxu0 0.0
    %591 = vmatprep.subr.mxu0 0.0
    %592 = vmatpush1.msra.mxu0 0.0
    %593 = vmatprep.subr.mxu0 0.0
    %594 = vmatpush1.msra.mxu0 0.0
    %595 = vmatprep.subr.mxu0 0.0
    %596 = vmatpush1.msra.mxu0 0.0
    %597 = vmatprep.subr.mxu0 0.0
    %598 = vmatpush1.msra.mxu0 0.0
    %599 = vmatprep.subr.mxu0 0.0
    %600 = vmatpush1.msra.mxu0 0.0
    %601 = vmatprep.subr.mxu0 0.0
    %602 = vmatpush1.msra.mxu0 0.0
    %603 = vmatprep.subr.mxu0 0.0
    %604 = vmatpush1.msra.mxu0 0.0
    %605 = vmatprep.subr.mxu0 0.0
    %606 = vmatpush1.msra.mxu0 0.0
    %607 = vmatprep.mubr.f32.mxu0 0.0
    %v608 = vand.u32 %v467, 4294901760
    %609 = vmatmul.mubr.f32.gmra.mrb[0].mxu0 %v608
    %v610 = vpop.f32.mrb[0].mxu0
    %v611 = vadd.f32 %v540, %v610
    %v612 = vpop.f32.mrb[0].mxu0
    %613 = vdwg.mxu0
    %614 = vmatprep.subr.mxu0 0.0
    %615 = vmatpush1.msra.mxu0 0.0
    %616 = vmatprep.subr.mxu0 0.0
    %617 = vmatpush1.msra.mxu0 0.0
    %618 = vmatprep.subr.mxu0 0.0
    %619 = vmatpush1.msra.mxu0 0.0
    %620 = vmatprep.subr.mxu0 0.0
    %621 = vmatpush1.msra.mxu0 0.0
    %622 = vmatprep.subr.mxu0 0.0
    %623 = vmatpush1.msra.mxu0 0.0
    %624 = vmatprep.subr.mxu0 0.0
    %625 = vmatpush1.msra.mxu0 0.0
    %626 = vmatprep.subr.mxu0 0.0
    %627 = vmatpush1.msra.mxu0 0.0
    %628 = vmatprep.subr.mxu0 0.0
    %629 = vmatpush1.msra.mxu0 0.0
    %630 = vmatprep.subr.mxu0 0.0
    %631 = vmatpush1.msra.mxu0 0.0
    %632 = vmatprep.subr.mxu0 0.0
    %633 = vmatpush1.msra.mxu0 0.0
    %634 = vmatprep.subr.mxu0 0.0
    %635 = vmatpush1.msra.mxu0 0.0
    %636 = vmatprep.subr.mxu0 0.0
    %637 = vmatpush1.msra.mxu0 0.0
    %638 = vmatprep.subr.mxu0 0.0
    %639 = vmatpush1.msra.mxu0 0.0
    %640 = vmatprep.subr.mxu0 0.0
    %641 = vmatpush1.msra.mxu0 0.0
    %642 = vmatprep.subr.mxu0 0.0
    %643 = vmatpush1.msra.mxu0 0.0
    %644 = vmatprep.subr.mxu0 0.0
    %645 = vmatpush1.msra.mxu0 0.0
    %646 = vmatprep.subr.mxu0 0.0
    %647 = vmatpush1.msra.mxu0 0.0
    %648 = vmatprep.subr.mxu0 0.0
    %649 = vmatpush1.msra.mxu0 0.0
    %650 = vmatprep.subr.mxu0 0.0
    %651 = vmatpush1.msra.mxu0 0.0
    %652 = vmatprep.subr.mxu0 0.0
    %653 = vmatpush1.msra.mxu0 0.0
    %654 = vmatprep.subr.mxu0 0.0
    %655 = vmatpush1.msra.mxu0 0.0
    %656 = vmatprep.subr.mxu0 0.0
    %657 = vmatpush1.msra.mxu0 0.0
    %658 = vmatprep.subr.mxu0 0.0
    %659 = vmatpush1.msra.mxu0 0.0
    %660 = vmatprep.subr.mxu0 0.0
    %661 = vmatpush1.msra.mxu0 0.0
    %662 = vmatprep.subr.mxu0 0.0
    %663 = vmatpush1.msra.mxu0 0.0
    %664 = vmatprep.subr.mxu0 0.0
    %665 = vmatpush1.msra.mxu0 0.0
    %666 = vmatprep.subr.mxu0 0.0
    %667 = vmatpush1.msra.mxu0 0.0
    %668 = vmatprep.subr.mxu0 0.0
    %669 = vmatpush1.msra.mxu0 0.0
    %670 = vmatprep.subr.mxu0 0.0
    %671 = vmatpush1.msra.mxu0 0.0
    %672 = vmatprep.subr.mxu0 0.0
    %673 = vmatpush1.msra.mxu0 0.0
    %674 = vmatprep.subr.mxu0 0.0
    %675 = vmatpush1.msra.mxu0 0.0
    %676 = vmatprep.subr.mxu0 0.0
    %677 = vmatpush1.msra.mxu0 0.0
    %678 = vmatprep.mubr.f32.mxu0 0.0
    %v679 = vand.u32 %v467, 4294901760
    %v680 = vsub.f32 %v467, %v679
    %681 = vmatmul.mubr.f32.gmra.mrb[0].mxu0 %v680
    %v682 = vpop.f32.mrb[0].mxu0
    %v683 = vadd.f32 %v611, %v682
    %v684 = vpop.f32.mrb[0].mxu0
    %685 = vdwg.mxu0
    %686 = vmatprep.subr.mxu0 0.0
    %687 = vmatpush1.msra.mxu0 1.0
    %688 = vmatprep.subr.mxu0 0.0
    %689 = vmatpush1.msra.mxu0 1.0
    %690 = vmatprep.subr.mxu0 0.0
    %691 = vmatpush1.msra.mxu0 1.0
    %692 = vmatprep.subr.mxu0 0.0
    %693 = vmatpush1.msra.mxu0 1.0
    %694 = vmatprep.subr.mxu0 0.0
    %695 = vmatpush1.msra.mxu0 1.0
    %696 = vmatprep.subr.mxu0 0.0
    %697 = vmatpush1.msra.mxu0 1.0
    %698 = vmatprep.subr.mxu0 0.0
    %699 = vmatpush1.msra.mxu0 1.0
    %700 = vmatprep.subr.mxu0 0.0
    %701 = vmatpush1.msra.mxu0 1.0
    %702 = vmatprep.subr.mxu0 0.0
    %703 = vmatpush1.msra.mxu0 1.0
    %704 = vmatprep.subr.mxu0 0.0
    %705 = vmatpush1.msra.mxu0 1.0
    %706 = vmatprep.subr.mxu0 0.0
    %707 = vmatpush1.msra.mxu0 1.0
    %708 = vmatprep.subr.mxu0 0.0
    %709 = vmatpush1.msra.mxu0 1.0
    %710 = vmatprep.subr.mxu0 0.0
    %711 = vmatpush1.msra.mxu0 1.0
    %712 = vmatprep.subr.mxu0 0.0
    %713 = vmatpush1.msra.mxu0 1.0
    %714 = vmatprep.subr.mxu0 0.0
    %715 = vmatpush1.msra.mxu0 1.0
    %716 = vmatprep.subr.mxu0 0.0
    %717 = vmatpush1.msra.mxu0 1.0
    %718 = vmatprep.subr.mxu0 0.0
    %719 = vmatpush1.msra.mxu0 0.0
    %720 = vmatprep.subr.mxu0 0.0
    %721 = vmatpush1.msra.mxu0 0.0
    %722 = vmatprep.subr.mxu0 0.0
    %723 = vmatpush1.msra.mxu0 0.0
    %724 = vmatprep.subr.mxu0 0.0
    %725 = vmatpush1.msra.mxu0 0.0
    %726 = vmatprep.subr.mxu0 0.0
    %727 = vmatpush1.msra.mxu0 0.0
    %728 = vmatprep.subr.mxu0 0.0
    %729 = vmatpush1.msra.mxu0 0.0
    %730 = vmatprep.subr.mxu0 0.0
    %731 = vmatpush1.msra.mxu0 0.0
    %732 = vmatprep.subr.mxu0 0.0
    %733 = vmatpush1.msra.mxu0 0.0
    %734 = vmatprep.subr.mxu0 0.0
    %735 = vmatpush1.msra.mxu0 0.0
    %736 = vmatprep.subr.mxu0 0.0
    %737 = vmatpush1.msra.mxu0 0.0
    %738 = vmatprep.subr.mxu0 0.0
    %739 = vmatpush1.msra.mxu0 0.0
    %740 = vmatprep.subr.mxu0 0.0
    %741 = vmatpush1.msra.mxu0 0.0
    %742 = vmatprep.subr.mxu0 0.0
    %743 = vmatpush1.msra.mxu0 0.0
    %744 = vmatprep.subr.mxu0 0.0
    %745 = vmatpush1.msra.mxu0 0.0
    %746 = vmatprep.subr.mxu0 0.0
    %747 = vmatpush1.msra.mxu0 0.0
    %748 = vmatprep.subr.mxu0 0.0
    %749 = vmatpush1.msra.mxu0 0.0
    %750 = vmatprep.mubr.f32.mxu0 0.0
    %v751 = vand.u32 %v467, 4294901760
    %v752 = vsub.f32 %v467, %v751
    %v753 = vand.u32 %v752, 4294901760
    %754 = vmatmul.mubr.f32.gmra.mrb[0].mxu0 %v753
    %v755 = vpop.f32.mrb[0].mxu0
    %v756 = vadd.f32 %v683, %v755
    %v757 = vpop.f32.mrb[0].mxu0
    %758 = vdwg.mxu0
    %759 = vmatprep.subr.mxu0 0.0
    %760 = vmatpush1.msra.mxu0 0.0
    %761 = vmatprep.subr.mxu0 0.0
    %762 = vmatpush1.msra.mxu0 0.0
    %763 = vmatprep.subr.mxu0 0.0
    %764 = vmatpush1.msra.mxu0 0.0
    %765 = vmatprep.subr.mxu0 0.0
    %766 = vmatpush1.msra.mxu0 0.0
    %767 = vmatprep.subr.mxu0 0.0
    %768 = vmatpush1.msra.mxu0 0.0
    %769 = vmatprep.subr.mxu0 0.0
    %770 = vmatpush1.msra.mxu0 0.0
    %771 = vmatprep.subr.mxu0 0.0
    %772 = vmatpush1.msra.mxu0 0.0
    %773 = vmatprep.subr.mxu0 0.0
    %774 = vmatpush1.msra.mxu0 0.0
    %775 = vmatprep.subr.mxu0 0.0
    %776 = vmatpush1.msra.mxu0 0.0
    %777 = vmatprep.subr.mxu0 0.0
    %778 = vmatpush1.msra.mxu0 0.0
    %779 = vmatprep.subr.mxu0 0.0
    %780 = vmatpush1.msra.mxu0 0.0
    %781 = vmatprep.subr.mxu0 0.0
    %782 = vmatpush1.msra.mxu0 0.0
    %783 = vmatprep.subr.mxu0 0.0
    %784 = vmatpush1.msra.mxu0 0.0
    %785 = vmatprep.subr.mxu0 0.0
    %786 = vmatpush1.msra.mxu0 0.0
    %787 = vmatprep.subr.mxu0 0.0
    %788 = vmatpush1.msra.mxu0 0.0
    %789 = vmatprep.subr.mxu0 0.0
    %790 = vmatpush1.msra.mxu0 0.0
    %791 = vmatprep.subr.mxu0 0.0
    %792 = vmatpush1.msra.mxu0 0.0
    %793 = vmatprep.subr.mxu0 0.0
    %794 = vmatpush1.msra.mxu0 0.0
    %795 = vmatprep.subr.mxu0 0.0
    %796 = vmatpush1.msra.mxu0 0.0
    %797 = vmatprep.subr.mxu0 0.0
    %798 = vmatpush1.msra.mxu0 0.0
    %799 = vmatprep.subr.mxu0 0.0
    %800 = vmatpush1.msra.mxu0 0.0
    %801 = vmatprep.subr.mxu0 0.0
    %802 = vmatpush1.msra.mxu0 0.0
    %803 = vmatprep.subr.mxu0 0.0
    %804 = vmatpush1.msra.mxu0 0.0
    %805 = vmatprep.subr.mxu0 0.0
    %806 = vmatpush1.msra.mxu0 0.0
    %807 = vmatprep.subr.mxu0 0.0
    %808 = vmatpush1.msra.mxu0 0.0
    %809 = vmatprep.subr.mxu0 0.0
    %810 = vmatpush1.msra.mxu0 0.0
    %811 = vmatprep.subr.mxu0 0.0
    %812 = vmatpush1.msra.mxu0 0.0
    %813 = vmatprep.subr.mxu0 0.0
    %814 = vmatpush1.msra.mxu0 0.0
    %815 = vmatprep.subr.mxu0 0.0
    %816 = vmatpush1.msra.mxu0 0.0
    %817 = vmatprep.subr.mxu0 0.0
    %818 = vmatpush1.msra.mxu0 0.0
    %819 = vmatprep.subr.mxu0 0.0
    %820 = vmatpush1.msra.mxu0 0.0
    %821 = vmatprep.subr.mxu0 0.0
    %822 = vmatpush1.msra.mxu0 0.0
    %823 = vmatprep.mubr.f32.mxu0 0.0
    %v824 = vand.u32 %v467, 4294901760
    %825 = vmatmul.mubr.f32.gmra.mrb[0].mxu0 %v824
    %v826 = vpop.f32.mrb[0].mxu0
    %v827 = vadd.f32 %v756, %v826
    %v828 = vpop.f32.mrb[0].mxu0
    %829 = vdwg.mxu0
    %830 = vmatprep.subr.mxu0 0.0
    %831 = vmatpush1.msra.mxu0 1.0
    %832 = vmatprep.subr.mxu0 0.0
    %833 = vmatpush1.msra.mxu0 1.0
    %834 = vmatprep.subr.mxu0 0.0
    %835 = vmatpush1.msra.mxu0 1.0
    %836 = vmatprep.subr.mxu0 0.0
    %837 = vmatpush1.msra.mxu0 1.0
    %838 = vmatprep.subr.mxu0 0.0
    %839 = vmatpush1.msra.mxu0 1.0
    %840 = vmatprep.subr.mxu0 0.0
    %841 = vmatpush1.msra.mxu0 1.0
    %842 = vmatprep.subr.mxu0 0.0
    %843 = vmatpush1.msra.mxu0 1.0
    %844 = vmatprep.subr.mxu0 0.0
    %845 = vmatpush1.msra.mxu0 1.0
    %846 = vmatprep.subr.mxu0 0.0
    %847 = vmatpush1.msra.mxu0 1.0
    %848 = vmatprep.subr.mxu0 0.0
    %849 = vmatpush1.msra.mxu0 1.0
    %850 = vmatprep.subr.mxu0 0.0
    %851 = vmatpush1.msra.mxu0 1.0
    %852 = vmatprep.subr.mxu0 0.0
    %853 = vmatpush1.msra.mxu0 1.0
    %854 = vmatprep.subr.mxu0 0.0
    %855 = vmatpush1.msra.mxu0 1.0
    %856 = vmatprep.subr.mxu0 0.0
    %857 = vmatpush1.msra.mxu0 1.0
    %858 = vmatprep.subr.mxu0 0.0
    %859 = vmatpush1.msra.mxu0 1.0
    %860 = vmatprep.subr.mxu0 0.0
    %861 = vmatpush1.msra.mxu0 1.0
    %862 = vmatprep.subr.mxu0 0.0
    %863 = vmatpush1.msra.mxu0 0.0
    %864 = vmatprep.subr.mxu0 0.0
    %865 = vmatpush1.msra.mxu0 0.0
    %866 = vmatprep.subr.mxu0 0.0
    %867 = vmatpush1.msra.mxu0 0.0
    %868 = vmatprep.subr.mxu0 0.0
    %869 = vmatpush1.msra.mxu0 0.0
    %870 = vmatprep.subr.mxu0 0.0
    %871 = vmatpush1.msra.mxu0 0.0
    %872 = vmatprep.subr.mxu0 0.0
    %873 = vmatpush1.msra.mxu0 0.0
    %874 = vmatprep.subr.mxu0 0.0
    %875 = vmatpush1.msra.mxu0 0.0
    %876 = vmatprep.subr.mxu0 0.0
    %877 = vmatpush1.msra.mxu0 0.0
    %878 = vmatprep.subr.mxu0 0.0
    %879 = vmatpush1.msra.mxu0 0.0
    %880 = vmatprep.subr.mxu0 0.0
    %881 = vmatpush1.msra.mxu0 0.0
    %882 = vmatprep.subr.mxu0 0.0
    %883 = vmatpush1.msra.mxu0 0.0
    %884 = vmatprep.subr.mxu0 0.0
    %885 = vmatpush1.msra.mxu0 0.0
    %886 = vmatprep.subr.mxu0 0.0
    %887 = vmatpush1.msra.mxu0 0.0
    %888 = vmatprep.subr.mxu0 0.0
    %889 = vmatpush1.msra.mxu0 0.0
    %890 = vmatprep.subr.mxu0 0.0
    %891 = vmatpush1.msra.mxu0 0.0
    %892 = vmatprep.subr.mxu0 0.0
    %893 = vmatpush1.msra.mxu0 0.0
    %894 = vmatprep.mubr.f32.mxu0 0.0
    %v895 = vand.u32 %v467, 4294901760
    %896 = vmatmul.mubr.f32.gmra.mrb[0].mxu0 %v895
    %v897 = vpop.f32.mrb[0].mxu0
    %v898 = vadd.f32 %v827, %v897
    %v899 = vpop.f32.mrb[0].mxu0
    %900 = vdwg.mxu0
    %vm901 = vcmp.ne.s32.totalorder %v20, 4294967196
    %v902 = vlog2.pop %v464
    %v903 = vmul.f32 %v902, 0.6931472
    %v904 = vsub.f32 %v903, %v898
    %v905 = vsel %vm901, %v904, 0.0
    %v906 = vld [vmem:[#allocation2] sm:$0x1]
    %vm907 = vcmask 7168
    %v908 = vsel %vm907, %v905, 0.0
    %909 = vadd.xlane.f32.xlu0 %v908
    %v910 = vpop.xlane.xlu0 %909
    %v911 = vrot.slane %v910, 4
    %v912 = vadd.f32 %v910, %v911
    %v913 = vrot.slane %v912, 2
    %v914 = vadd.f32 %v912, %v913
    %v915 = vrot.slane %v914, 1
    %v916 = vadd.f32 %v914, %v915
    %s917 = vtos %v916
    %v918 = vstv %s917
    %v919 = vadd.f32 %v906, %v918
    %vm920 = vcmask 0
    %921 = vst.msk [vmem:[#allocation2] sm:$0x1] %vm920, %v919
    %v922 = vld [vmem:[#allocation3] sm:$0x1]
    %v923 = vsel %vm901, 1, 0
    %v924 = vcvt.s32.f32 %v923
    %v925 = vsel %vm907, %v924, 0.0
    %926 = vadd.xlane.f32.xlu0 %v925
    %v927 = vpop.xlane.xlu0 %926
    %v928 = vrot.slane %v927, 4
    %v929 = vadd.f32 %v927, %v928
    %v930 = vrot.slane %v929, 2
    %v931 = vadd.f32 %v929, %v930
    %v932 = vrot.slane %v931, 1
    %v933 = vadd.f32 %v931, %v932
    %s934 = vtos %v933
    %v935 = vstv %s934
    %v936 = vadd.f32 %v922, %v935
    %937 = vst.msk [vmem:[#allocation3] sm:$0x1] %vm920, %v936
    // Predicated region
    $region14: #{tpu_custom_call.1} parent=1 // pred_check
      %p938 = pneg %p12
    $region15: #{tpu_custom_call.1} parent=1 // pred_check_branch
      %940 = sbr.rel (%p938) target = $region17
    $region16: #{tpu_custom_call.1} parent=1 // pred_region
      %v941 = vld [vmem:[#allocation2] sm:$0x1]
      %v942 = vld [vmem:[#allocation3] sm:$0x1]
      %v943 = vrcp.pop %v942
      %v944 = vmul.f32 %v941, %v943
      %945 = vst.msk [vmem:[#allocation4] sm:$0x1] %vm920, %v944
    $region17: #{tpu_custom_call.1} parent=1 // pred_fallthru
      _
    // Predicated region
    $region18: #{tpu_custom_call.1} parent=1 // pred_check
      _
    $region19: #{tpu_custom_call.1} parent=1 // pred_check_branch
      %947 = sbr.rel (0) target = $region21
    $region20: #{tpu_custom_call.1} parent=1 // pred_region
      %s949 = ssub.s32 16, 16
      %950 = vsyncadd [#allocation5], %s949
      %s952 = sshll.u32 [#allocation4], 4
      %s953 = int_to_ptr.vmem [resolvable:$true] %s952
      %955 = dma.vmem_to_hbm [thread:$0]  %s953, 16, %s2, [#allocation5]
    $region21: #{tpu_custom_call.1} parent=1 // pred_fallthru
      _
    // Predicated region
    $region22: #{tpu_custom_call.1} parent=1 // pred_check
      _
    $region23: #{tpu_custom_call.1} parent=1 // pred_check_branch
      %957 = sbr.rel (0) target = $region25
    $region24: #{tpu_custom_call.1} parent=1 // pred_region
      %958 = dma.done [#allocation5], 16
    $region25: #{tpu_custom_call.1} parent=1 // pred_fallthru
      _
    %959 = vsyncpa [#allocation5], 1

</llo_original>
